<compile_context>
chip_gen: v5e
topology: v5e:2x2
jax: 0.10.0
libtpu: 0.0.40
codegen_flags: <defaults>
</compile_context>

<pallas_src>
import jax
import jax.numpy as jnp
from jax.experimental import pallas as pl
from jax.experimental.pallas import tpu as pltpu


def _affine_kernel(w_ref, b_ref, x_ref, o_ref):
    # w_ref, b_ref: (1, 1) f32 scalars in SMEM.
    # x_ref, o_ref: (rows_tile, cols) lane-dense tiles in VMEM.
    # in_features == 1 => x @ W^T + b is an elementwise affine map (VPU only).
    y = x_ref[...].astype(jnp.float32) * w_ref[0, 0] + b_ref[0, 0]
    o_ref[...] = y.astype(o_ref.dtype)


def manual_linear_regression(x, weight, bias, *, block_rows=1024, block_cols=1024):
    """x: (N, 1), weight: (1, 1), bias: (1,) -> (N, 1); same math as nn.Linear(1, 1)."""
    n, f = x.shape
    assert f == 1 and weight.shape == (1, 1) and bias.shape == (1,)

    w_smem = weight.reshape(1, 1).astype(jnp.float32)
    b_smem = bias.reshape(1, 1).astype(jnp.float32)

    # --- Lane-dense repack: (N, 1) -> (rows_padded, cols) ---------------------
    flat = x.reshape(-1)
    total = flat.shape[0]

    # Lane width: full block_cols for big inputs, otherwise the widest multiple
    # of 128 that still leaves >= 8 rows (minimum 128).
    if total >= block_cols * 8:
        cols = block_cols
    else:
        cols = max(128, min(block_cols, ((total // 8) // 128) * 128))

    # Pad rows only up to a multiple of 8 sublanes (<= 8*cols - 1 extra elems,
    # ~32 KB worst case), never a whole tile of zeros.
    rows_padded = ((pl.cdiv(total, cols) + 7) // 8) * 8
    padded_total = rows_padded * cols

    # Tile rows: <= block_rows, multiple of 8.  For large single-block inputs,
    # split into 2 grid steps so the "parallel" axis can shard across v7x's
    # 2 TensorCores.
    rows_tile = min(block_rows, rows_padded)
    if rows_tile == rows_padded and rows_padded >= 256:
        rows_tile = ((rows_padded // 2 + 7) // 8) * 8
    grid = (pl.cdiv(rows_padded, rows_tile),)

    needs_pad = padded_total != total
    if needs_pad:
        flat = jnp.pad(flat, (0, padded_total - total))
    slab = flat.reshape(rows_padded, cols)

    out_slab = pl.pallas_call(
        _affine_kernel,
        out_shape=jax.ShapeDtypeStruct((rows_padded, cols), x.dtype),
        grid_spec=pl.GridSpec(
            grid=grid,
            in_specs=[
                pl.BlockSpec(memory_space=pltpu.MemorySpace.SMEM),   # weight
                pl.BlockSpec(memory_space=pltpu.MemorySpace.SMEM),   # bias
                pl.BlockSpec((rows_tile, cols), lambda i: (i, 0)),   # x slab
            ],
            out_specs=pl.BlockSpec((rows_tile, cols), lambda i: (i, 0)),
        ),
        compiler_params=pltpu.CompilerParams(
            dimension_semantics=("parallel",),
            # 4 buffers x 4 MiB = 16 MiB at default block; explicit limit keeps
            # this compile-safe on v5e (16 MiB default scoped VMEM) and leaves
            # headroom under v7x's 64 MiB physical VMEM.
            vmem_limit_bytes=48 << 20,
        ),
        cost_estimate=pl.CostEstimate(
            flops=2 * padded_total,
            transcendentals=0,
            bytes_accessed=8 * padded_total,
        ),
    )(w_smem, b_smem, slab)

    # Undo the repack; only slice when padding actually happened (the slice is
    # a separate HBM read+write, so it must stay off the aligned fast path).
    if needs_pad:
        return out_slab.reshape(-1)[:total].reshape(n, 1)
    return out_slab.reshape(n, 1)


if __name__ == "__main__":
    key = jax.random.PRNGKey(0)
    kx, kw, kb = jax.random.split(key, 3)

    # nn.Linear(1, 1) shapes.  batch=300 exercises the (minimal) padding path.
    batch = 300
    x = jax.random.normal(kx, (batch, 1), dtype=jnp.float32)
    weight = jax.random.uniform(kw, (1, 1), dtype=jnp.float32, minval=-1.0, maxval=1.0)
    bias = jax.random.uniform(kb, (1,), dtype=jnp.float32, minval=-1.0, maxval=1.0)

    y = manual_linear_regression(x, weight, bias)
    jax.block_until_ready(y)

    y_ref = x @ weight.T + bias
    assert y.shape == y_ref.shape, "shape mismatch vs reference"
    assert jnp.allclose(y, y_ref, atol=1e-6), "mismatch vs reference"

    # Aligned path (no pad, no slice): total = 8 * 1024 elements.
    x2 = jax.random.normal(kx, (8192, 1), dtype=jnp.float32)
    y2 = manual_linear_regression(x2, weight, bias)
    jax.block_until_ready(y2)
    assert jnp.allclose(y2, x2 @ weight.T + bias, atol=1e-6), "mismatch (aligned path)"

    print("KERNEL_OK")
</pallas_src>

<mosaic_0001>
module attributes {stable_mosaic.version = 11 : i64} {
  func.func @_affine_kernel(%arg0: i32, %arg1: memref<1x1xf32, #tpu.memory_space<smem>>, %arg2: memref<1x1xf32, #tpu.memory_space<smem>>, %arg3: memref<8x128xf32, #tpu.memory_space<vmem>>, %arg4: memref<8x128xf32, #tpu.memory_space<vmem>>) attributes {dimension_semantics = [#tpu.dimension_semantics<parallel>], iteration_bounds = array<i64: 1>, scalar_prefetch = 0 : i64, scratch_operands = 0 : i64, tpu.core_type = #tpu.core_type<tc>, window_params = [{transform_indices = @transform_0, window_bounds = array<i64: 1, 1>}, {transform_indices = @transform_1, window_bounds = array<i64: 1, 1>}, {transform_indices = @transform_2, window_bounds = array<i64: 8, 128>}, {transform_indices = @transform_3, window_bounds = array<i64: 8, 128>}]} {
    %c0 = arith.constant 0 : index
    %c0_0 = arith.constant 0 : index
    %0 = vector.load %arg3[%c0, %c0_0] : memref<8x128xf32, #tpu.memory_space<vmem>>, vector<8x128xf32>
    %c0_1 = arith.constant 0 : index
    %c0_2 = arith.constant 0 : index
    %1 = memref.load %arg1[%c0_1, %c0_2] : memref<1x1xf32, #tpu.memory_space<smem>>
    %2 = vector.broadcast %1 : f32 to vector<8x128xf32>
    %3 = arith.mulf %0, %2 : vector<8x128xf32>
    %c0_3 = arith.constant 0 : index
    %c0_4 = arith.constant 0 : index
    %4 = memref.load %arg2[%c0_3, %c0_4] : memref<1x1xf32, #tpu.memory_space<smem>>
    %5 = vector.broadcast %4 : f32 to vector<8x128xf32>
    %6 = arith.addf %3, %5 : vector<8x128xf32>
    %c0_5 = arith.constant 0 : index
    %c0_6 = arith.constant 0 : index
    %7 = vector.load %arg4[%c0_5, %c0_6] : memref<8x128xf32, #tpu.memory_space<vmem>>, vector<8x128xf32>
    tpu.vector_store %arg4[%c0_5, %c0_6], %6 {strides = array<i32>} : memref<8x128xf32, #tpu.memory_space<vmem>>, vector<8x128xf32>,
    return
  }
  func.func @transform_0(%arg0: i32) -> (i32, i32) {
    %c0_i32 = arith.constant 0 : i32
    %c0_i32_0 = arith.constant 0 : i32
    %c0_i32_1 = arith.constant 0 : i32
    return %c0_i32, %c0_i32_0 : i32, i32
  }
  func.func @transform_1(%arg0: i32) -> (i32, i32) {
    %c0_i32 = arith.constant 0 : i32
    %c0_i32_0 = arith.constant 0 : i32
    %c0_i32_1 = arith.constant 0 : i32
    return %c0_i32, %c0_i32_0 : i32, i32
  }
  func.func @transform_2(%arg0: i32) -> (i32, i32) {
    %c0_i32 = arith.constant 0 : i32
    %c0_i32_0 = arith.constant 0 : i32
    return %arg0, %c0_i32 : i32, i32
  }
  func.func @transform_3(%arg0: i32) -> (i32, i32) {
    %c0_i32 = arith.constant 0 : i32
    %c0_i32_0 = arith.constant 0 : i32
    return %arg0, %c0_i32 : i32, i32
  }
}

</mosaic_0001>

<llo_original>
// kernel: tpu_custom_call.1
$region0: #{tpu_custom_call.1}
  #allocation0 [shape = 'u32[]', space=smem, size = 0x4, offset = 0x4, fixed_abs, tag = 'smem constant byte address 0x4 - core index']
  #allocation1 [shape = 'u32[72,128]{1,0:T(1,128)}', space=vmem, size = 0x9000, scoped, tag = 'internal scratch']
  #allocation2 [shape = 'f32[1,1]{1,0:T(1,128)S(6)}', space=smem, size = 0x200, scoped, tag = 'scoped memory for tpu_custom_call.1']
  #allocation3 [shape = 'f32[1,1]{1,0:T(1,128)S(6)}', space=smem, size = 0x200, scoped, tag = 'scoped memory for tpu_custom_call.1']
  %s0 = inlined_call_operand.<no memory space> [shape: f32[1,1], index: 0, kind: input, shape index: {}]
  %s1 = inlined_call_operand.<no memory space> [shape: f32[1,1], index: 1, kind: input, shape index: {}]
  %s2 = inlined_call_operand.hbm [shape: f32[8,128], index: 2, kind: input, shape index: {}]
  %s3 = inlined_call_operand.hbm [shape: f32[8,128], index: 3, kind: output, shape index: {}]
  %s4 = sld [smem:[#allocation0]]
  $region26: #{tpu_custom_call.1} parent=0
    _
  %s6 = ssub.s32 1, %s4
  %s7 = scalar_select 0, %s6, %s4
  %8 = sst [smem:[#allocation2]] %s0
  %9 = sst [smem:[#allocation3]] %s1
  $region1: #{tpu_custom_call.1} parent=0
    #allocation4 [shape = 'u8[4096]{0}', space=vmem, size = 0x1000, scoped, tag = 'input window, operand 2, single buffered']
    #allocation5 [shape = 's32[1]{0}', space=sflag, size = 0x4, scoped, tag = 'scoped memory for tpu_custom_call.1']
    #allocation6 [shape = 's32[1]{0}', space=sflag, size = 0x4, scoped, tag = 'scoped memory for tpu_custom_call.1']
    #allocation7 [shape = 'u8[4096]{0}', space=vmem, size = 0x1000, scoped, tag = 'output window, operand 0, single buffered']
    %10 = vsyncpa [#allocation5], 0
    %11 = vsyncpa [#allocation6], 0
    // Predicated region
    $region2: #{tpu_custom_call.1} parent=1 // pred_check
      _
    $region3: #{tpu_custom_call.1} parent=1 // pred_check_branch
      %13 = sbr.rel (0) target = $region5
    $region4: #{tpu_custom_call.1} parent=1 // pred_region
      _
    $region5: #{tpu_custom_call.1} parent=1 // pred_fallthru
      _
    // Predicated region
    $region6: #{tpu_custom_call.1} parent=1 // pred_check
      _
    $region7: #{tpu_custom_call.1} parent=1 // pred_check_branch
      %15 = sbr.rel (0) target = $region9
    $region8: #{tpu_custom_call.1} parent=1 // pred_region
      _
    $region9: #{tpu_custom_call.1} parent=1 // pred_fallthru
      _
    // Predicated region
    $region10: #{tpu_custom_call.1} parent=1 // pred_check
      _
    $region11: #{tpu_custom_call.1} parent=1 // pred_check_branch
      %17 = sbr.rel (0) target = $region13
    $region12: #{tpu_custom_call.1} parent=1 // pred_region
      %19 = vsyncadd [#allocation5], 0
      %s21 = sshll.u32 %s2, 4
      %s22 = int_to_ptr.hbm [resolvable:$true] %s21
      %s23 = sshll.u32 [#allocation4], 4
      %s24 = int_to_ptr.vmem [resolvable:$true] %s23
      %26 = dma.hbm_to_vmem [thread:$0]  %s22, 128, %s24, [#allocation5]
    $region13: #{tpu_custom_call.1} parent=1 // pred_fallthru
      _
    // Predicated region
    $region14: #{tpu_custom_call.1} parent=1 // pred_check
      _
    $region15: #{tpu_custom_call.1} parent=1 // pred_check_branch
      %28 = sbr.rel (0) target = $region17
    $region16: #{tpu_custom_call.1} parent=1 // pred_region
      %30 = dma.done [#allocation5], 128
    $region17: #{tpu_custom_call.1} parent=1 // pred_fallthru
      _
    %v31 = vld [vmem:[#allocation4] sm:$0xff]
    %s32 = sld [smem:[#allocation2]]
    %v33 = vstv %s32
    %v34 = vmul.f32 %v31, %v33
    %s35 = sld [smem:[#allocation3]]
    %v36 = vstv %s35
    %v37 = vadd.f32 %v34, %v36
    %38 = vst [vmem:[#allocation7] sm:$0xff] %v37
    // Predicated region
    $region18: #{tpu_custom_call.1} parent=1 // pred_check
      _
    $region19: #{tpu_custom_call.1} parent=1 // pred_check_branch
      %40 = sbr.rel (0) target = $region21
    $region20: #{tpu_custom_call.1} parent=1 // pred_region
      %42 = vsyncadd [#allocation6], 0
      %s44 = sshll.u32 [#allocation7], 4
      %s45 = int_to_ptr.vmem [resolvable:$true] %s44
      %s46 = sshll.u32 %s3, 4
      %s47 = int_to_ptr.hbm [resolvable:$true] %s46
      %49 = dma.vmem_to_hbm [thread:$0]  %s45, 128, %s47, [#allocation6]
    $region21: #{tpu_custom_call.1} parent=1 // pred_fallthru
      _
    // Predicated region
    $region22: #{tpu_custom_call.1} parent=1 // pred_check
      _
    $region23: #{tpu_custom_call.1} parent=1 // pred_check_branch
      %51 = sbr.rel (0) target = $region25
    $region24: #{tpu_custom_call.1} parent=1 // pred_region
      %53 = dma.done [#allocation6], 128
    $region25: #{tpu_custom_call.1} parent=1 // pred_fallthru
      _
    %54 = vsyncpa [#allocation5], 1
    %55 = vsyncpa [#allocation6], 1

</llo_original>
